<compile_context>
chip_gen: v5e
topology: v5e:2x2
jax: 0.10.0
libtpu: 0.0.40
codegen_flags: <defaults>
</compile_context>

<pallas_src>
import jax
import jax.numpy as jnp
from jax.experimental import pallas as pl
from jax.experimental.pallas import tpu as pltpu


def _round_up(n, m):
    return ((n + m - 1) // m) * m


def _mlp_kernel(xT_ref, w1_ref, b1_ref, w2_ref, b2_ref, w3_ref, b3_ref, o_ref):
    """Fused 3-layer MLP on one (17, TB) batch tile (batch on the lane dim)."""
    xT = xT_ref[...]                                                   # (17, TB)

    # Layer 1: (32,17) @ (17,TB) -> (32,TB), f32 accumulate on the MXU.
    h1 = jnp.dot(w1_ref[...], xT, preferred_element_type=jnp.float32)
    h1 = jnp.maximum(h1 + b1_ref[...], 0.0)                            # ReLU, f32 VPU
    h1 = h1.astype(w2_ref.dtype)                                       # bf16 cast iff bf16 path

    # Layer 2: (32,32) @ (32,TB) -> (32,TB).
    h2 = jnp.dot(w2_ref[...], h1, preferred_element_type=jnp.float32)
    h2 = jnp.maximum(h2 + b2_ref[...], 0.0)                            # ReLU, f32 VPU

    # Output layer 32 -> 1 off the MXU: broadcast-mul (VPU) + sublane reduce
    # (XLU). w3 is a (32,1) f32 column, b3 is (1,1).
    z = jnp.sum(h2 * w3_ref[...], axis=0, keepdims=True) + b3_ref[...]  # (1, TB)

    # Sigmoid: exp on the EUP; jax.nn.sigmoid is the numerically-stable form.
    o_ref[...] = jax.nn.sigmoid(z)


def neural_network_forward(x, params, *, tile_b=512, use_bf16=False):
    """Forward pass. x: (B, 17) float32. Returns (B, 1) float32.

    params: dict with w1 (32,17), b1 (32,1), w2 (32,32), b2 (32,1),
    w3 (32,1) column, b3 (1,1) — i.e. (out, in) weights / (out, 1) biases.
    """
    B = x.shape[0]

    # Batch tile: multiple of 128 (lane width); 512 default amortizes the
    # ~0.35 us per-step overhead while staying tiny in VMEM.
    tb = min(_round_up(tile_b, 128), _round_up(B, 128))
    Bp = _round_up(B, tb)

    compute_dtype = jnp.bfloat16 if use_bf16 else jnp.float32

    # Layout plumbing in the wrapper: batch -> lanes, pad to a whole tile.
    xT = jnp.transpose(x)                                   # (17, B)
    if Bp != B:
        xT = jnp.pad(xT, ((0, 0), (0, Bp - B)))
    xT = xT.astype(compute_dtype)

    w1 = params["w1"].astype(compute_dtype)                 # (32, 17)
    w2 = params["w2"].astype(compute_dtype)                 # (32, 32)
    b1 = params["b1"].astype(jnp.float32)                   # (32, 1)
    b2 = params["b2"].astype(jnp.float32)                   # (32, 1)
    w3 = params["w3"].astype(jnp.float32)                   # (32, 1)  VPU path -> keep f32
    b3 = params["b3"].astype(jnp.float32)                   # (1, 1)

    n_tiles = Bp // tb
    resident = lambda a: pl.BlockSpec(a.shape, lambda i: (0,) * a.ndim)  # stays in VMEM

    out = pl.pallas_call(
        _mlp_kernel,
        out_shape=jax.ShapeDtypeStruct((1, Bp), jnp.float32),
        grid=(n_tiles,),
        in_specs=[
            pl.BlockSpec((17, tb), lambda i: (0, i)),       # streamed x^T tile
            resident(w1), resident(b1),
            resident(w2), resident(b2),
            resident(w3), resident(b3),
        ],
        out_specs=pl.BlockSpec((1, tb), lambda i: (0, i)),  # lane-dense output tile
        compiler_params=pltpu.CompilerParams(
            dimension_semantics=("parallel",)),             # megacore on v7x
    )(xT, w1, b1, w2, b2, w3, b3)

    return jnp.transpose(out[:, :B])                        # (B, 1)


def init_params(key):
    """Deterministic init mirroring torch.nn.Linear (uniform +/- 1/sqrt(fan_in)).

    Weights stored as (out_features, in_features); biases as (out, 1) columns.
    The output-layer weight is stored as a (32, 1) column for the VPU path.
    """
    def linear(key, fan_in, fan_out):
        kw, kb = jax.random.split(key)
        bound = 1.0 / jnp.sqrt(jnp.float32(fan_in))
        w = jax.random.uniform(kw, (fan_out, fan_in), jnp.float32, -bound, bound)
        b = jax.random.uniform(kb, (fan_out, 1), jnp.float32, -bound, bound)
        return w, b

    k1, k2, k3 = jax.random.split(key, 3)
    w1, b1 = linear(k1, 17, 32)          # (32, 17), (32, 1)
    w2, b2 = linear(k2, 32, 32)          # (32, 32), (32, 1)
    w3, b3 = linear(k3, 32, 1)           # (1, 32),  (1, 1)
    return {"w1": w1, "b1": b1, "w2": w2, "b2": b2,
            "w3": jnp.transpose(w3), "b3": b3}   # w3 -> (32, 1)


def _reference(x, p):
    h1 = jnp.maximum(x @ p["w1"].T + p["b1"][:, 0], 0.0)
    h2 = jnp.maximum(h1 @ p["w2"].T + p["b2"][:, 0], 0.0)
    return jax.nn.sigmoid(h2 @ p["w3"] + p["b3"][:, 0])


if __name__ == "__main__":
    key = jax.random.PRNGKey(0)
    kx, kp = jax.random.split(key)
    params = init_params(kp)

    # Small batch consistent with the module's (B, 17) input.
    x_small = jax.random.normal(kx, (8, 17), dtype=jnp.float32)
    out_small = jax.block_until_ready(neural_network_forward(x_small, params))
    ref_small = _reference(x_small, params)
    assert out_small.shape == (8, 1), out_small.shape
    assert jnp.allclose(out_small, ref_small, atol=1e-5, rtol=1e-5), (
        f"max err {jnp.max(jnp.abs(out_small - ref_small))}")

    # Larger, non-multiple-of-tile batch: exercises the grid + padding path.
    x_big = jax.random.normal(jax.random.PRNGKey(1), (777, 17), dtype=jnp.float32)
    out_big = jax.block_until_ready(neural_network_forward(x_big, params))
    ref_big = _reference(x_big, params)
    assert out_big.shape == (777, 1), out_big.shape
    assert jnp.allclose(out_big, ref_big, atol=1e-5, rtol=1e-5), (
        f"max err {jnp.max(jnp.abs(out_big - ref_big))}")

    # Optional bf16 MXU path (v6e/v7x win); f32 accumulate, looser tolerance.
    out_bf16 = jax.block_until_ready(
        neural_network_forward(x_big, params, use_bf16=True))
    assert jnp.allclose(out_bf16, ref_big, atol=3e-2), (
        f"bf16 max err {jnp.max(jnp.abs(out_bf16 - ref_big))}")

    print("KERNEL_OK")
</pallas_src>

<mosaic_0001>
module attributes {stable_mosaic.version = 11 : i64} {
  func.func @_mlp_kernel(%arg0: i32, %arg1: memref<17x128xf32, #tpu.memory_space<vmem>>, %arg2: memref<32x17xf32, #tpu.memory_space<vmem>>, %arg3: memref<32x1xf32, #tpu.memory_space<vmem>>, %arg4: memref<32x32xf32, #tpu.memory_space<vmem>>, %arg5: memref<32x1xf32, #tpu.memory_space<vmem>>, %arg6: memref<32x1xf32, #tpu.memory_space<vmem>>, %arg7: memref<1x1xf32, #tpu.memory_space<vmem>>, %arg8: memref<1x128xf32, #tpu.memory_space<vmem>>) attributes {dimension_semantics = [#tpu.dimension_semantics<parallel>], iteration_bounds = array<i64: 1>, scalar_prefetch = 0 : i64, scratch_operands = 0 : i64, tpu.core_type = #tpu.core_type<tc>, window_params = [{transform_indices = @transform_0, window_bounds = array<i64: 17, 128>}, {pipeline_mode = #tpu.pipeline_mode<synchronous>, transform_indices = @transform_1, window_bounds = array<i64: 32, 17>}, {pipeline_mode = #tpu.pipeline_mode<synchronous>, transform_indices = @transform_2, window_bounds = array<i64: 32, 1>}, {pipeline_mode = #tpu.pipeline_mode<synchronous>, transform_indices = @transform_3, window_bounds = array<i64: 32, 32>}, {pipeline_mode = #tpu.pipeline_mode<synchronous>, transform_indices = @transform_4, window_bounds = array<i64: 32, 1>}, {pipeline_mode = #tpu.pipeline_mode<synchronous>, transform_indices = @transform_5, window_bounds = array<i64: 32, 1>}, {pipeline_mode = #tpu.pipeline_mode<synchronous>, transform_indices = @transform_6, window_bounds = array<i64: 1, 1>}, {transform_indices = @transform_7, window_bounds = array<i64: 1, 128>}]} {
    %c0 = arith.constant 0 : index
    %c0_0 = arith.constant 0 : index
    %0 = vector.load %arg1[%c0, %c0_0] : memref<17x128xf32, #tpu.memory_space<vmem>>, vector<17x128xf32>
    %c0_1 = arith.constant 0 : index
    %c0_2 = arith.constant 0 : index
    %1 = vector.load %arg2[%c0_1, %c0_2] : memref<32x17xf32, #tpu.memory_space<vmem>>, vector<32x17xf32>
    %cst = arith.constant dense<0.000000e+00> : vector<32x128xf32>
    %2 = tpu.matmul %1, %0, %cst {dimension_numbers = #tpu.dot_dimension_numbers<[1], [0], [0], [1], [0, 0, 1, 1], [], []>} : vector<32x17xf32>, vector<17x128xf32>, vector<32x128xf32> -> vector<32x128xf32>
    %c0_3 = arith.constant 0 : index
    %c0_4 = arith.constant 0 : index
    %3 = vector.load %arg3[%c0_3, %c0_4] : memref<32x1xf32, #tpu.memory_space<vmem>>, vector<32x1xf32>
    %4 = vector.broadcast %3 : vector<32x1xf32> to vector<32x128xf32>
    %5 = arith.addf %2, %4 : vector<32x128xf32>
    %cst_5 = arith.constant 0.000000e+00 : f32
    %6 = vector.broadcast %cst_5 : f32 to vector<32x128xf32>
    %7 = arith.maximumf %5, %6 : vector<32x128xf32>
    %c0_6 = arith.constant 0 : index
    %c0_7 = arith.constant 0 : index
    %8 = vector.load %arg4[%c0_6, %c0_7] : memref<32x32xf32, #tpu.memory_space<vmem>>, vector<32x32xf32>
    %cst_8 = arith.constant dense<0.000000e+00> : vector<32x128xf32>
    %9 = tpu.matmul %8, %7, %cst_8 {dimension_numbers = #tpu.dot_dimension_numbers<[1], [0], [0], [1], [0, 0, 1, 1], [], []>} : vector<32x32xf32>, vector<32x128xf32>, vector<32x128xf32> -> vector<32x128xf32>
    %c0_9 = arith.constant 0 : index
    %c0_10 = arith.constant 0 : index
    %10 = vector.load %arg5[%c0_9, %c0_10] : memref<32x1xf32, #tpu.memory_space<vmem>>, vector<32x1xf32>
    %11 = vector.broadcast %10 : vector<32x1xf32> to vector<32x128xf32>
    %12 = arith.addf %9, %11 : vector<32x128xf32>
    %cst_11 = arith.constant 0.000000e+00 : f32
    %13 = vector.broadcast %cst_11 : f32 to vector<32x128xf32>
    %14 = arith.maximumf %12, %13 : vector<32x128xf32>
    %c0_12 = arith.constant 0 : index
    %c0_13 = arith.constant 0 : index
    %15 = vector.load %arg6[%c0_12, %c0_13] : memref<32x1xf32, #tpu.memory_space<vmem>>, vector<32x1xf32>
    %16 = vector.broadcast %15 : vector<32x1xf32> to vector<32x128xf32>
    %17 = arith.mulf %14, %16 : vector<32x128xf32>
    %cst_14 = arith.constant dense<0.000000e+00> : vector<128xf32>
    %18 = vector.multi_reduction <add>, %17, %cst_14 [0] : vector<32x128xf32> to vector<128xf32>
    %19 = vector.shape_cast %18 : vector<128xf32> to vector<1x128xf32>
    %c0_15 = arith.constant 0 : index
    %c0_16 = arith.constant 0 : index
    %20 = vector.load %arg7[%c0_15, %c0_16] : memref<1x1xf32, #tpu.memory_space<vmem>>, vector<1x1xf32>
    %21 = vector.broadcast %20 : vector<1x1xf32> to vector<1x128xf32>
    %22 = arith.addf %19, %21 : vector<1x128xf32>
    %23 = arith.negf %22 : vector<1x128xf32>
    %24 = math.exp %23 : vector<1x128xf32>
    %cst_17 = arith.constant 1.000000e+00 : f32
    %25 = vector.broadcast %cst_17 : f32 to vector<1x128xf32>
    %26 = arith.addf %25, %24 : vector<1x128xf32>
    %27 = arith.divf %25, %26 : vector<1x128xf32>
    %c0_18 = arith.constant 0 : index
    %c0_19 = arith.constant 0 : index
    %28 = vector.load %arg8[%c0_18, %c0_19] : memref<1x128xf32, #tpu.memory_space<vmem>>, vector<1x128xf32>
    tpu.vector_store %arg8[%c0_18, %c0_19], %27 {strides = array<i32>} : memref<1x128xf32, #tpu.memory_space<vmem>>, vector<1x128xf32>,
    return
  }
  func.func @transform_0(%arg0: i32) -> (i32, i32) {
    %c0_i32 = arith.constant 0 : i32
    %c0_i32_0 = arith.constant 0 : i32
    return %c0_i32, %arg0 : i32, i32
  }
  func.func @transform_1(%arg0: i32) -> (i32, i32) {
    %c0_i32 = arith.constant 0 : i32
    %c0_i32_0 = arith.constant 0 : i32
    %c0_i32_1 = arith.constant 0 : i32
    return %c0_i32, %c0_i32_0 : i32, i32
  }
  func.func @transform_2(%arg0: i32) -> (i32, i32) {
    %c0_i32 = arith.constant 0 : i32
    %c0_i32_0 = arith.constant 0 : i32
    %c0_i32_1 = arith.constant 0 : i32
    return %c0_i32, %c0_i32_0 : i32, i32
  }
  func.func @transform_3(%arg0: i32) -> (i32, i32) {
    %c0_i32 = arith.constant 0 : i32
    %c0_i32_0 = arith.constant 0 : i32
    %c0_i32_1 = arith.constant 0 : i32
    return %c0_i32, %c0_i32_0 : i32, i32
  }
  func.func @transform_4(%arg0: i32) -> (i32, i32) {
    %c0_i32 = arith.constant 0 : i32
    %c0_i32_0 = arith.constant 0 : i32
    %c0_i32_1 = arith.constant 0 : i32
    return %c0_i32, %c0_i32_0 : i32, i32
  }
  func.func @transform_5(%arg0: i32) -> (i32, i32) {
    %c0_i32 = arith.constant 0 : i32
    %c0_i32_0 = arith.constant 0 : i32
    %c0_i32_1 = arith.constant 0 : i32
    return %c0_i32, %c0_i32_0 : i32, i32
  }
  func.func @transform_6(%arg0: i32) -> (i32, i32) {
    %c0_i32 = arith.constant 0 : i32
    %c0_i32_0 = arith.constant 0 : i32
    %c0_i32_1 = arith.constant 0 : i32
    return %c0_i32, %c0_i32_0 : i32, i32
  }
  func.func @transform_7(%arg0: i32) -> (i32, i32) {
    %c0_i32 = arith.constant 0 : i32
    %c0_i32_0 = arith.constant 0 : i32
    return %c0_i32, %arg0 : i32, i32
  }
}

</mosaic_0001>

<llo_original>
// kernel: tpu_custom_call.1
$region0: #{tpu_custom_call.1}
  #allocation0 [shape = 'u32[]', space=smem, size = 0x4, offset = 0x4, fixed_abs, tag = 'smem constant byte address 0x4 - core index']
  #allocation1 [shape = 'u32[72,128]{1,0:T(1,128)}', space=vmem, size = 0x9000, scoped, tag = 'internal scratch']
  #allocation2 [shape = 'f32[1,1]{1,0:T(1,128)S(1)}', space=vmem, size = 0x200, scoped, tag = 'scoped memory for tpu_custom_call.1']
  %s0 = inlined_call_operand.vmem [shape: f32[17,128], index: 0, kind: input, shape index: {}]
  %s1 = inlined_call_operand.vmem [shape: f32[32,17], index: 1, kind: input, shape index: {}]
  %s2 = inlined_call_operand.vmem [shape: f32[32,1], index: 2, kind: input, shape index: {}]
  %s3 = inlined_call_operand.vmem [shape: f32[32,32], index: 3, kind: input, shape index: {}]
  %s4 = inlined_call_operand.vmem [shape: f32[32,1], index: 4, kind: input, shape index: {}]
  %s5 = inlined_call_operand.vmem [shape: f32[32,1], index: 5, kind: input, shape index: {}]
  %s6 = inlined_call_operand.<no memory space> [shape: f32[1,1], index: 6, kind: input, shape index: {}]
  %s7 = inlined_call_operand.hbm [shape: f32[1,128], index: 7, kind: output, shape index: {}]
  %s8 = sld [smem:[#allocation0]]
  $region38: #{tpu_custom_call.1} parent=0
    _
  %s10 = ssub.s32 1, %s8
  %s11 = scalar_select 0, %s10, %s8
  %v12 = vstv %s6
  %13 = vst [vmem:[#allocation2] sm:$0x1] %v12
  $region1: #{tpu_custom_call.1} parent=0
    #allocation3 [shape = 'u8[512]{0}', space=vmem, size = 0x400, scoped, tag = 'output window, operand 0, single buffered']
    #allocation4 [shape = 's32[1]{0}', space=sflag, size = 0x4, scoped, tag = 'scoped memory for tpu_custom_call.1']
    %14 = vsyncpa [#allocation4], 0
    // Predicated region
    $region2: #{tpu_custom_call.1} parent=1 // pred_check
      _
    $region3: #{tpu_custom_call.1} parent=1 // pred_check_branch
      %16 = sbr.rel (0) target = $region5
    $region4: #{tpu_custom_call.1} parent=1 // pred_region
      _
    $region5: #{tpu_custom_call.1} parent=1 // pred_fallthru
      _
    // Predicated region
    $region6: #{tpu_custom_call.1} parent=1 // pred_check
      _
    $region7: #{tpu_custom_call.1} parent=1 // pred_check_branch
      %18 = sbr.rel (0) target = $region9
    $region8: #{tpu_custom_call.1} parent=1 // pred_region
      _
    $region9: #{tpu_custom_call.1} parent=1 // pred_fallthru
      _
    // Predicated region
    $region10: #{tpu_custom_call.1} parent=1 // pred_check
      _
    $region11: #{tpu_custom_call.1} parent=1 // pred_check_branch
      %20 = sbr.rel (0) target = $region13
    $region12: #{tpu_custom_call.1} parent=1 // pred_region
      _
    $region13: #{tpu_custom_call.1} parent=1 // pred_fallthru
      _
    // Predicated region
    $region14: #{tpu_custom_call.1} parent=1 // pred_check
      _
    $region15: #{tpu_custom_call.1} parent=1 // pred_check_branch
      %22 = sbr.rel (0) target = $region17
    $region16: #{tpu_custom_call.1} parent=1 // pred_region
      _
    $region17: #{tpu_custom_call.1} parent=1 // pred_fallthru
      _
    // Predicated region
    $region18: #{tpu_custom_call.1} parent=1 // pred_check
      _
    $region19: #{tpu_custom_call.1} parent=1 // pred_check_branch
      %24 = sbr.rel (0) target = $region21
    $region20: #{tpu_custom_call.1} parent=1 // pred_region
      _
    $region21: #{tpu_custom_call.1} parent=1 // pred_fallthru
      _
    // Predicated region
    $region22: #{tpu_custom_call.1} parent=1 // pred_check
      _
    $region23: #{tpu_custom_call.1} parent=1 // pred_check_branch
      %26 = sbr.rel (0) target = $region25
    $region24: #{tpu_custom_call.1} parent=1 // pred_region
      _
    $region25: #{tpu_custom_call.1} parent=1 // pred_fallthru
      _
    // Predicated region
    $region26: #{tpu_custom_call.1} parent=1 // pred_check
      _
    $region27: #{tpu_custom_call.1} parent=1 // pred_check_branch
      %28 = sbr.rel (0) target = $region29
    $region28: #{tpu_custom_call.1} parent=1 // pred_region
      _
    $region29: #{tpu_custom_call.1} parent=1 // pred_fallthru
      _
    %v29 = vld [vmem:[%s0] sm:$0xff]
    %v30 = vld [vmem:[%s0 + $0x8] sm:$0xff]
    %v31 = vld [vmem:[%s0 + $0x10] sm:$0x1]
    %v32 = vld [vmem:[%s1] sm:$0xff]
    %v33 = vld [vmem:[%s1 + $0x8] sm:$0xff]
    %v34 = vld [vmem:[%s1 + $0x10] sm:$0xff]
    %v35 = vld [vmem:[%s1 + $0x18] sm:$0xff]
    %v36 = vld [vmem:[%s2] sm:$0xff]
    %v37 = vld [vmem:[%s2 + $0x8] sm:$0xff]
    %v38 = vld [vmem:[%s2 + $0x10] sm:$0xff]
    %v39 = vld [vmem:[%s2 + $0x18] sm:$0xff]
    %41 = vset.pattern.permute.xlu0 0
    %42 = vperm.xlu0 %41, %v36
    %v43 = vpop.permute.xlu0 %42
    %46 = vset.pattern.permute.xlu0 0
    %47 = vperm.xlu0 %46, %v37
    %v48 = vpop.permute.xlu0 %47
    %51 = vset.pattern.permute.xlu0 0
    %52 = vperm.xlu0 %51, %v38
    %v53 = vpop.permute.xlu0 %52
    %56 = vset.pattern.permute.xlu0 0
    %57 = vperm.xlu0 %56, %v39
    %v58 = vpop.permute.xlu0 %57
    %vm60 = vcmask 138240
    %v62 = vsel %vm60, %v32, 0
    %v65 = vsel %vm60, %v33, 0
    %v68 = vsel %vm60, %v34, 0
    %v71 = vsel %vm60, %v35, 0
    %vm73 = vcmask 1040384
    %v75 = vsel %vm73, %v31, 0
    %77 = vmatpush.msra.mxu0 0.0
    %78 = vmatpush.msra.mxu0 0.0
    %79 = vmatpush.msra.mxu0 0.0
    %80 = vmatpush.msra.mxu0 0.0
    %81 = vmatpush.msra.mxu0 0.0
    %82 = vmatpush.msra.mxu0 0.0
    %83 = vmatpush.msra.mxu0 0.0
    %84 = vmatpush.msra.mxu0 0.0
    %85 = vmatpush.msra.mxu0 0.0
    %86 = vmatpush.msra.mxu0 0.0
    %87 = vmatpush.msra.mxu0 0.0
    %88 = vmatpush.msra.mxu0 0.0
    %89 = vmatpush.msra.mxu0 0.0
    %90 = vmatpush.msra.mxu0 %v75
    %91 = vmatpush.msra.mxu0 %v30
    %92 = vmatpush.msra.mxu0 %v29
    %93 = vmatmul.f32.gmra.mxu0 %v62
    %v94 = vpop.f32.mrf.mxu0
    %v95 = vadd.f32 %v43, %v94
    %96 = vmatmul.f32.gmra.mxu0 %v65
    %v97 = vpop.f32.mrf.mxu0
    %v98 = vadd.f32 %v48, %v97
    %99 = vmatmul.f32.gmra.mxu0 %v68
    %v100 = vpop.f32.mrf.mxu0
    %v101 = vadd.f32 %v53, %v100
    %102 = vmatmul.f32.gmra.mxu0 %v71
    %v103 = vpop.f32.mrf.mxu0
    %v104 = vadd.f32 %v58, %v103
    %105 = vdwg.mxu0
    %v106 = vmax.f32 %v95, 0.0
    %v107 = vmax.f32 %v98, 0.0
    %v108 = vmax.f32 %v101, 0.0
    %v109 = vmax.f32 %v104, 0.0
    %v110 = vld [vmem:[%s3] sm:$0xff]
    %v111 = vld [vmem:[%s3 + $0x8] sm:$0xff]
    %v112 = vld [vmem:[%s3 + $0x10] sm:$0xff]
    %v113 = vld [vmem:[%s3 + $0x18] sm:$0xff]
    %v114 = vld [vmem:[%s4] sm:$0xff]
    %v115 = vld [vmem:[%s4 + $0x8] sm:$0xff]
    %v116 = vld [vmem:[%s4 + $0x10] sm:$0xff]
    %v117 = vld [vmem:[%s4 + $0x18] sm:$0xff]
    %119 = vset.pattern.permute.xlu0 0
    %120 = vperm.xlu0 %119, %v114
    %v121 = vpop.permute.xlu0 %120
    %124 = vset.pattern.permute.xlu0 0
    %125 = vperm.xlu0 %124, %v115
    %v126 = vpop.permute.xlu0 %125
    %129 = vset.pattern.permute.xlu0 0
    %130 = vperm.xlu0 %129, %v116
    %v131 = vpop.permute.xlu0 %130
    %134 = vset.pattern.permute.xlu0 0
    %135 = vperm.xlu0 %134, %v117
    %v136 = vpop.permute.xlu0 %135
    %vm138 = vcmask 261120
    %v140 = vsel %vm138, %v110, 0
    %v143 = vsel %vm138, %v111, 0
    %v146 = vsel %vm138, %v112, 0
    %v149 = vsel %vm138, %v113, 0
    %151 = vmatpush.msra.mxu0 0.0
    %152 = vmatpush.msra.mxu0 0.0
    %153 = vmatpush.msra.mxu0 0.0
    %154 = vmatpush.msra.mxu0 0.0
    %155 = vmatpush.msra.mxu0 0.0
    %156 = vmatpush.msra.mxu0 0.0
    %157 = vmatpush.msra.mxu0 0.0
    %158 = vmatpush.msra.mxu0 0.0
    %159 = vmatpush.msra.mxu0 0.0
    %160 = vmatpush.msra.mxu0 0.0
    %161 = vmatpush.msra.mxu0 0.0
    %162 = vmatpush.msra.mxu0 0.0
    %163 = vmatpush.msra.mxu0 %v109
    %164 = vmatpush.msra.mxu0 %v108
    %165 = vmatpush.msra.mxu0 %v107
    %166 = vmatpush.msra.mxu0 %v106
    %167 = vmatmul.f32.gmra.mxu0 %v140
    %v168 = vpop.f32.mrf.mxu0
    %v169 = vadd.f32 %v121, %v168
    %170 = vmatmul.f32.gmra.mxu0 %v143
    %v171 = vpop.f32.mrf.mxu0
    %v172 = vadd.f32 %v126, %v171
    %173 = vmatmul.f32.gmra.mxu0 %v146
    %v174 = vpop.f32.mrf.mxu0
    %v175 = vadd.f32 %v131, %v174
    %176 = vmatmul.f32.gmra.mxu0 %v149
    %v177 = vpop.f32.mrf.mxu0
    %v178 = vadd.f32 %v136, %v177
    %179 = vdwg.mxu0
    %v180 = vmax.f32 %v169, 0.0
    %v181 = vmax.f32 %v172, 0.0
    %v182 = vmax.f32 %v175, 0.0
    %v183 = vmax.f32 %v178, 0.0
    %v184 = vld [vmem:[%s5] sm:$0xff]
    %v185 = vld [vmem:[%s5 + $0x8] sm:$0xff]
    %v186 = vld [vmem:[%s5 + $0x10] sm:$0xff]
    %v187 = vld [vmem:[%s5 + $0x18] sm:$0xff]
    %189 = vset.pattern.permute.xlu0 0
    %190 = vperm.xlu0 %189, %v184
    %v191 = vpop.permute.xlu0 %190
    %194 = vset.pattern.permute.xlu0 0
    %195 = vperm.xlu0 %194, %v185
    %v196 = vpop.permute.xlu0 %195
    %199 = vset.pattern.permute.xlu0 0
    %200 = vperm.xlu0 %199, %v186
    %v201 = vpop.permute.xlu0 %200
    %204 = vset.pattern.permute.xlu0 0
    %205 = vperm.xlu0 %204, %v187
    %v206 = vpop.permute.xlu0 %205
    %v208 = vmul.f32 %v180, %v191
    %v209 = vmul.f32 %v181, %v196
    %v210 = vmul.f32 %v182, %v201
    %v211 = vmul.f32 %v183, %v206
    %v212 = vadd.f32 %v208, %v209
    %v213 = vadd.f32 %v212, %v210
    %v214 = vadd.f32 %v213, %v211
    %v215 = vrot.slane %v214, 4
    %v216 = vadd.f32 %v214, %v215
    %v217 = vrot.slane %v216, 2
    %v218 = vadd.f32 %v216, %v217
    %v219 = vrot.slane %v218, 1
    %v220 = vadd.f32 %v218, %v219
    %v221 = vld [vmem:[#allocation2] sm:$0x1]
    %223 = vset.pattern.permute.xlu0 0
    %224 = vperm.xlu0 %223, %v221
    %v225 = vpop.permute.xlu0 %224
    %v227 = vperm.slane %v225, 0
    %v228 = vadd.f32 %v220, %v227
    %v229 = vxor.u32 %v228, 2147483648
    %v230 = vmul.f32 %v229, 1.442695
    %v231 = vpow.pop %v230
    %v232 = vadd.f32 %v231, 1.0
    %v233 = vrcp.pop %v232
    %v234 = vmul.f32 %v232, %v233
    %v235 = vsub.f32 1.0, %v234
    %v236 = vmul.f32 %v233, %v235
    %v237 = vadd.f32 %v233, %v236
    %vm238 = vweird.f32 %v232
    %vm239 = vweird.f32 %v233
    %vm240 = vmor %vm238, %vm239
    %v241 = vsel %vm240, %v233, %v237
    %v242 = vand.u32 2147483647, %v232
    %vm243 = vcmp.eq.f32.partialorder %v242, 8.507059e+37
    %v244 = vand.u32 %v232, 2147483648
    %v245 = vor.u32 1.1754944e-38, %v244
    %v246 = vsel %vm243, %v245, %v241
    %v247 = vmul.f32 1.0, %v246
    %248 = vst [vmem:[#allocation3] sm:$0x1] %v247
    // Predicated region
    $region30: #{tpu_custom_call.1} parent=1 // pred_check
      _
    $region31: #{tpu_custom_call.1} parent=1 // pred_check_branch
      %250 = sbr.rel (0) target = $region33
    $region32: #{tpu_custom_call.1} parent=1 // pred_region
      %252 = vsyncadd [#allocation4], 0
      %s254 = sshll.u32 [#allocation3], 4
      %s255 = int_to_ptr.vmem [resolvable:$true] %s254
      %s256 = sshll.u32 %s7, 4
      %s257 = int_to_ptr.hbm [resolvable:$true] %s256
      %259 = dma.vmem_to_hbm [thread:$0]  %s255, 16, %s257, [#allocation4]
    $region33: #{tpu_custom_call.1} parent=1 // pred_fallthru
      _
    // Predicated region
    $region34: #{tpu_custom_call.1} parent=1 // pred_check
      _
    $region35: #{tpu_custom_call.1} parent=1 // pred_check_branch
      %261 = sbr.rel (0) target = $region37
    $region36: #{tpu_custom_call.1} parent=1 // pred_region
      %263 = dma.done [#allocation4], 16
    $region37: #{tpu_custom_call.1} parent=1 // pred_fallthru
      _
    %264 = vsyncpa [#allocation4], 1

</llo_original>
